<compile_context>
chip_gen: v5e
topology: v5e:2x2
jax: 0.10.0
libtpu: 0.0.40
codegen_flags: <defaults>
</compile_context>

<pallas_src>
import functools

import jax
import jax.numpy as jnp
from jax.experimental import pallas as pl
from jax.experimental.pallas import tpu as pltpu


# ---------------------------------------------------------------------------
# Fused encoder kernel: node projection + L residual EdgeGAT layers for a
# block of `Bb` graphs per grid step.
# ---------------------------------------------------------------------------
def _encoder_kernel(x_ref, e_ref, wn_ref, bn_ref, me_ref, ce_ref,
                    w_ref, wb_ref, adst_ref, asrc_ref, o_ref,
                    *, n_layers, negative_slope):
    Bb, n, Fx = x_ref.shape
    H = wn_ref.shape[1]
    Fe = me_ref.shape[-1]

    # fc_node + bn_node (folded on the host into one affine map)
    x2 = x_ref[...].reshape(Bb * n, Fx)
    h2 = jnp.dot(x2, wn_ref[...], preferred_element_type=jnp.float32) + bn_ref[...]

    # raw edge block: read from HBM once, reused by every layer
    e2 = e_ref[...].reshape(Bb * n, n, Fe)                       # (Bb*n, n, Fe)

    def layer_body(l, h2):
        w_l = w_ref[l]                                           # (H, H)
        wb_l = wb_ref[l]                                         # (1, H)
        a_dst_l = adst_ref[l]                                    # (1, H)
        a_src_l = asrc_ref[l]                                    # (1, H)
        m_l = me_ref[l]                                          # (1, Fe)
        c_l = ce_ref[l]                                          # (1, 1)

        wh2 = jnp.dot(h2, w_l, preferred_element_type=jnp.float32) + wb_l
        wh3 = wh2.reshape(Bb, n, H)

        # attention scores as VPU lane-reductions (no N=1 MXU matvecs)
        s_dst = jnp.sum(wh3 * a_dst_l[None], axis=-1, keepdims=True)   # (Bb, n, 1)
        s_src = jnp.sum(wh3 * a_src_l[None], axis=-1)[:, None, :]      # (Bb, 1, n)
        # folded edge logit bias: a_edge . bn_edge(fc_edge(e_raw))
        s_edge = (jnp.sum(e2 * m_l, axis=-1) + c_l).reshape(Bb, n, n)  # (Bb, n, n)

        logits = s_dst + s_src + s_edge
        z = jnp.where(logits > 0, logits, negative_slope * logits)     # leaky relu
        z = z - jnp.max(z, axis=-1, keepdims=True)
        p = jnp.exp(z)
        alpha = p * pl.reciprocal(jnp.sum(p, axis=-1, keepdims=True), approx=True)

        out = jnp.einsum('bij,bjh->bih', alpha, wh3,
                         preferred_element_type=jnp.float32)           # (Bb, n, H)
        return h2 + out.reshape(Bb * n, H)                             # residual

    h2 = jax.lax.fori_loop(0, n_layers, layer_body, h2, unroll=True)
    o_ref[...] = h2.reshape(Bb, n, H)


# ---------------------------------------------------------------------------
# Host-side helpers (tiny glue; all heavy work happens in the kernel).
# ---------------------------------------------------------------------------
def _fold_linear_bn(w, b, x_flat, eps=1e-5):
    """Fold Linear(w, b) + training-mode BatchNorm1d (gamma=1, beta=0, biased
    variance) into an equivalent affine map (exact algebra)."""
    n_rows = x_flat.shape[0]
    mean_x = jnp.mean(x_flat, axis=0)
    xc = x_flat - mean_x
    cov_x = (xc.T @ xc) / n_rows
    mean_h = mean_x @ w + b
    var_h = jnp.sum(w * (cov_x @ w), axis=0)
    inv_std = jax.lax.rsqrt(var_h + eps)
    return w * inv_std[None, :], (b - mean_h) * inv_std


def _choose_block_batch(batch, n, edge_feat, target_rows=512,
                        edge_budget_bytes=8 << 20):
    """Largest divisor of `batch` whose per-step block stays well inside VMEM
    (also safe for v7x's 64 MiB) while keeping >= 2 grid steps so both v7x
    TensorCores get work."""
    divisors = [d for d in range(1, batch + 1) if batch % d == 0]
    fits = [d for d in divisors
            if d * n <= target_rows
            and d * n * n * max(edge_feat, 1) * 4 <= edge_budget_bytes]
    if not fits:
        return 1
    multi_step = [d for d in fits if batch // d >= 2]
    return max(multi_step) if multi_step else max(fits)


def residual_edge_gat_encoder(x, demand, edge_attr, params, negative_slope):
    B, n, _ = x.shape
    Fe = edge_attr.shape[-1]
    H = params["w_node"].shape[1]
    L = params["w_all"].shape[0]

    xcat = jnp.concatenate([x, demand], axis=-1)                 # (B, n, Fx)
    Fx = xcat.shape[-1]

    # fold fc_node+bn_node and fc_edge+bn_edge(+a_edge) exactly (tiny glue)
    wn_f, bn_f = _fold_linear_bn(params["w_node"], params["b_node"],
                                 xcat.reshape(B * n, Fx))
    we_f, be_f = _fold_linear_bn(params["w_edge"], params["b_edge"],
                                 edge_attr.reshape(B * n * n, Fe))
    me_all = (params["a_edge_all"] @ we_f.T)[:, None, :]          # (L, 1, Fe)
    ce_all = (params["a_edge_all"] @ be_f)[:, None, None]         # (L, 1, 1)

    Bb = _choose_block_batch(B, n, Fe)
    grid = (B // Bb,)

    kernel = functools.partial(_encoder_kernel, n_layers=L,
                               negative_slope=negative_slope)
    return pl.pallas_call(
        kernel,
        out_shape=jax.ShapeDtypeStruct((B, n, H), jnp.float32),
        grid=grid,
        in_specs=[
            pl.BlockSpec((Bb, n, Fx), lambda g: (g, 0, 0)),
            pl.BlockSpec((Bb, n, n, Fe), lambda g: (g, 0, 0, 0)),
            pl.BlockSpec((Fx, H), lambda g: (0, 0)),
            pl.BlockSpec((1, H), lambda g: (0, 0)),
            pl.BlockSpec((L, 1, Fe), lambda g: (0, 0, 0)),
            pl.BlockSpec((L, 1, 1), lambda g: (0, 0, 0)),
            pl.BlockSpec((L, H, H), lambda g: (0, 0, 0)),
            pl.BlockSpec((L, 1, H), lambda g: (0, 0, 0)),
            pl.BlockSpec((L, 1, H), lambda g: (0, 0, 0)),
            pl.BlockSpec((L, 1, H), lambda g: (0, 0, 0)),
        ],
        out_specs=pl.BlockSpec((Bb, n, H), lambda g: (g, 0, 0)),
        compiler_params=pltpu.CompilerParams(
            dimension_semantics=("parallel",),
            vmem_limit_bytes=48 * 1024 * 1024,
        ),
    )(xcat, edge_attr, wn_f, bn_f.reshape(1, H), me_all, ce_all,
      params["w_all"], params["b_all"][:, None, :],
      params["a_dst_all"][:, None, :], params["a_src_all"][:, None, :])


# ---------------------------------------------------------------------------
# Pure-JAX reference (same assumed semantics) for a correctness check.
# ---------------------------------------------------------------------------
def _reference_forward(x, demand, edge_attr, params, negative_slope, eps=1e-5):
    B, n, _ = x.shape
    H = params["w_node"].shape[1]
    Fe = edge_attr.shape[-1]
    xcat = jnp.concatenate([x, demand], axis=-1).reshape(B * n, -1)
    h = xcat @ params["w_node"] + params["b_node"]
    h = (h - h.mean(0)) / jnp.sqrt(h.var(0) + eps)
    e = edge_attr.reshape(B * n * n, Fe) @ params["w_edge"] + params["b_edge"]
    e = (e - e.mean(0)) / jnp.sqrt(e.var(0) + eps)
    h = h.reshape(B, n, H)
    e = e.reshape(B, n, n, -1)
    for l in range(params["w_all"].shape[0]):
        wh = h @ params["w_all"][l] + params["b_all"][l]
        s_dst = (wh * params["a_dst_all"][l]).sum(-1, keepdims=True)
        s_src = (wh * params["a_src_all"][l]).sum(-1)[:, None, :]
        s_edge = (e * params["a_edge_all"][l]).sum(-1)
        logits = s_dst + s_src + s_edge
        z = jnp.where(logits > 0, logits, negative_slope * logits)
        z = z - z.max(-1, keepdims=True)
        p = jnp.exp(z)
        alpha = p / p.sum(-1, keepdims=True)
        h = h + jnp.einsum('bij,bjh->bih', alpha, wh)
    return h


def _xavier_uniform(key, shape):
    fan_in, fan_out = shape[0], shape[1]
    limit = (6.0 / (fan_in + fan_out)) ** 0.5
    return jax.random.uniform(key, shape, jnp.float32, -limit, limit)


if __name__ == "__main__":
    B, n = 2, 8                    # 2 graphs, 8 nodes each
    coord_dim, demand_dim = 2, 1
    node_input_dim = coord_dim + demand_dim
    edge_input_dim = 1
    hidden_dim = 32
    edge_dim = 16
    layers = 2
    negative_slope = 0.2

    key = jax.random.PRNGKey(0)
    ks = jax.random.split(key, 5 + layers)

    x = jax.random.normal(ks[0], (B, n, coord_dim), jnp.float32)
    demand = jax.random.normal(ks[1], (B, n, demand_dim), jnp.float32)
    edge_attr = jax.random.normal(ks[2], (B, n, n, edge_input_dim), jnp.float32)

    w_all, b_all, adst_all, asrc_all, aedge_all = [], [], [], [], []
    for l in range(layers):
        kw, ka = jax.random.split(ks[5 + l])
        w_all.append(_xavier_uniform(kw, (hidden_dim, hidden_dim)))
        b_all.append(jnp.zeros((hidden_dim,), jnp.float32))
        a = _xavier_uniform(ka, (2 * hidden_dim + edge_dim, 1))[:, 0]
        adst_all.append(a[:hidden_dim])
        asrc_all.append(a[hidden_dim:2 * hidden_dim])
        aedge_all.append(a[2 * hidden_dim:])

    params = {
        "w_node": _xavier_uniform(ks[3], (node_input_dim, hidden_dim)),
        "b_node": jnp.zeros((hidden_dim,), jnp.float32),
        "w_edge": _xavier_uniform(ks[4], (edge_input_dim, edge_dim)),
        "b_edge": jnp.zeros((edge_dim,), jnp.float32),
        "w_all": jnp.stack(w_all),           # (L, H, H)
        "b_all": jnp.stack(b_all),           # (L, H)
        "a_dst_all": jnp.stack(adst_all),    # (L, H)
        "a_src_all": jnp.stack(asrc_all),    # (L, H)
        "a_edge_all": jnp.stack(aedge_all),  # (L, edge_dim)
    }

    out = residual_edge_gat_encoder(x, demand, edge_attr, params, negative_slope)
    out = jax.block_until_ready(out)
    assert out.shape == (B, n, hidden_dim)

    ref = _reference_forward(x, demand, edge_attr, params, negative_slope)
    max_err = float(jnp.max(jnp.abs(out - ref)))
    assert max_err < 5e-2, f"mismatch vs reference: {max_err}"

    print("KERNEL_OK")
</pallas_src>

<mosaic_0001>
module attributes {stable_mosaic.version = 11 : i64} {
  func.func @_encoder_kernel(%arg0: i32, %arg1: memref<1x8x3xf32, #tpu.memory_space<vmem>>, %arg2: memref<1x8x8x1xf32, #tpu.memory_space<vmem>>, %arg3: memref<3x32xf32, #tpu.memory_space<vmem>>, %arg4: memref<1x32xf32, #tpu.memory_space<vmem>>, %arg5: memref<2x1x1xf32, #tpu.memory_space<vmem>>, %arg6: memref<2x1x1xf32, #tpu.memory_space<vmem>>, %arg7: memref<2x32x32xf32, #tpu.memory_space<vmem>>, %arg8: memref<2x1x32xf32, #tpu.memory_space<vmem>>, %arg9: memref<2x1x32xf32, #tpu.memory_space<vmem>>, %arg10: memref<2x1x32xf32, #tpu.memory_space<vmem>>, %arg11: memref<1x8x32xf32, #tpu.memory_space<vmem>>) attributes {dimension_semantics = [#tpu.dimension_semantics<parallel>], iteration_bounds = array<i64: 2>, scalar_prefetch = 0 : i64, scratch_operands = 0 : i64, tpu.core_type = #tpu.core_type<tc>, window_params = [{transform_indices = @transform_0, window_bounds = array<i64: 1, 8, 3>}, {transform_indices = @transform_1, window_bounds = array<i64: 1, 8, 8, 1>}, {pipeline_mode = #tpu.pipeline_mode<synchronous>, transform_indices = @transform_2, window_bounds = array<i64: 3, 32>}, {pipeline_mode = #tpu.pipeline_mode<synchronous>, transform_indices = @transform_3, window_bounds = array<i64: 1, 32>}, {pipeline_mode = #tpu.pipeline_mode<synchronous>, transform_indices = @transform_4, window_bounds = array<i64: 2, 1, 1>}, {pipeline_mode = #tpu.pipeline_mode<synchronous>, transform_indices = @transform_5, window_bounds = array<i64: 2, 1, 1>}, {pipeline_mode = #tpu.pipeline_mode<synchronous>, transform_indices = @transform_6, window_bounds = array<i64: 2, 32, 32>}, {pipeline_mode = #tpu.pipeline_mode<synchronous>, transform_indices = @transform_7, window_bounds = array<i64: 2, 1, 32>}, {pipeline_mode = #tpu.pipeline_mode<synchronous>, transform_indices = @transform_8, window_bounds = array<i64: 2, 1, 32>}, {pipeline_mode = #tpu.pipeline_mode<synchronous>, transform_indices = @transform_9, window_bounds = array<i64: 2, 1, 32>}, {transform_indices = @transform_10, window_bounds = array<i64: 1, 8, 32>}]} {
    %c0 = arith.constant 0 : index
    %c0_0 = arith.constant 0 : index
    %c0_1 = arith.constant 0 : index
    %0 = vector.load %arg1[%c0, %c0_0, %c0_1] : memref<1x8x3xf32, #tpu.memory_space<vmem>>, vector<1x8x3xf32>
    %1 = vector.shape_cast %0 : vector<1x8x3xf32> to vector<8x3xf32>
    %c0_2 = arith.constant 0 : index
    %c0_3 = arith.constant 0 : index
    %2 = vector.load %arg3[%c0_2, %c0_3] : memref<3x32xf32, #tpu.memory_space<vmem>>, vector<3x32xf32>
    %cst = arith.constant dense<0.000000e+00> : vector<8x32xf32>
    %3 = tpu.matmul %1, %2, %cst {dimension_numbers = #tpu.dot_dimension_numbers<[1], [0], [0], [1], [0, 0, 1, 1], [], []>} : vector<8x3xf32>, vector<3x32xf32>, vector<8x32xf32> -> vector<8x32xf32>
    %c0_4 = arith.constant 0 : index
    %c0_5 = arith.constant 0 : index
    %4 = vector.load %arg4[%c0_4, %c0_5] : memref<1x32xf32, #tpu.memory_space<vmem>>, vector<1x32xf32>
    %5 = vector.broadcast %4 : vector<1x32xf32> to vector<8x32xf32>
    %6 = arith.addf %3, %5 : vector<8x32xf32>
    %c0_6 = arith.constant 0 : index
    %c0_7 = arith.constant 0 : index
    %c0_8 = arith.constant 0 : index
    %c0_9 = arith.constant 0 : index
    %7 = vector.load %arg2[%c0_6, %c0_7, %c0_8, %c0_9] : memref<1x8x8x1xf32, #tpu.memory_space<vmem>>, vector<1x8x8x1xf32>
    %8 = vector.shape_cast %7 : vector<1x8x8x1xf32> to vector<8x8x1xf32>
    %c0_i32 = arith.constant 0 : i32
    %9 = arith.index_cast %c0_i32 : i32 to index
    %c0_10 = arith.constant 0 : index
    %c0_11 = arith.constant 0 : index
    %10 = vector.load %arg7[%9, %c0_10, %c0_11] : memref<2x32x32xf32, #tpu.memory_space<vmem>>, vector<1x32x32xf32>
    %11 = vector.shape_cast %10 : vector<1x32x32xf32> to vector<32x32xf32>
    %12 = arith.index_cast %c0_i32 : i32 to index
    %c0_12 = arith.constant 0 : index
    %c0_13 = arith.constant 0 : index
    %13 = vector.load %arg8[%12, %c0_12, %c0_13] : memref<2x1x32xf32, #tpu.memory_space<vmem>>, vector<1x1x32xf32>
    %14 = vector.shape_cast %13 : vector<1x1x32xf32> to vector<1x32xf32>
    %15 = arith.index_cast %c0_i32 : i32 to index
    %c0_14 = arith.constant 0 : index
    %c0_15 = arith.constant 0 : index
    %16 = vector.load %arg9[%15, %c0_14, %c0_15] : memref<2x1x32xf32, #tpu.memory_space<vmem>>, vector<1x1x32xf32>
    %17 = vector.shape_cast %16 : vector<1x1x32xf32> to vector<1x32xf32>
    %18 = arith.index_cast %c0_i32 : i32 to index
    %c0_16 = arith.constant 0 : index
    %c0_17 = arith.constant 0 : index
    %19 = vector.load %arg10[%18, %c0_16, %c0_17] : memref<2x1x32xf32, #tpu.memory_space<vmem>>, vector<1x1x32xf32>
    %20 = vector.shape_cast %19 : vector<1x1x32xf32> to vector<1x32xf32>
    %21 = arith.index_cast %c0_i32 : i32 to index
    %c0_18 = arith.constant 0 : index
    %c0_19 = arith.constant 0 : index
    %22 = vector.load %arg5[%21, %c0_18, %c0_19] : memref<2x1x1xf32, #tpu.memory_space<vmem>>, vector<1x1x1xf32>
    %23 = vector.shape_cast %22 : vector<1x1x1xf32> to vector<1x1xf32>
    %24 = arith.index_cast %c0_i32 : i32 to index
    %c0_20 = arith.constant 0 : index
    %c0_21 = arith.constant 0 : index
    %25 = vector.load %arg6[%24, %c0_20, %c0_21] : memref<2x1x1xf32, #tpu.memory_space<vmem>>, vector<1x1x1xf32>
    %26 = vector.shape_cast %25 : vector<1x1x1xf32> to vector<1x1xf32>
    %cst_22 = arith.constant dense<0.000000e+00> : vector<8x32xf32>
    %27 = tpu.matmul %6, %11, %cst_22 {dimension_numbers = #tpu.dot_dimension_numbers<[1], [0], [0], [1], [0, 0, 1, 1], [], []>} : vector<8x32xf32>, vector<32x32xf32>, vector<8x32xf32> -> vector<8x32xf32>
    %28 = vector.broadcast %14 : vector<1x32xf32> to vector<8x32xf32>
    %29 = arith.addf %27, %28 : vector<8x32xf32>
    %30 = vector.shape_cast %29 : vector<8x32xf32> to vector<1x8x32xf32>
    %31 = vector.shape_cast %17 : vector<1x32xf32> to vector<1x1x32xf32>
    %32 = vector.broadcast %31 : vector<1x1x32xf32> to vector<1x8x32xf32>
    %33 = arith.mulf %30, %32 : vector<1x8x32xf32>
    %cst_23 = arith.constant dense<0.000000e+00> : vector<1x8xf32>
    %34 = vector.multi_reduction <add>, %33, %cst_23 [2] : vector<1x8x32xf32> to vector<1x8xf32>
    %35 = vector.shape_cast %34 : vector<1x8xf32> to vector<1x8x1xf32>
    %36 = vector.shape_cast %20 : vector<1x32xf32> to vector<1x1x32xf32>
    %37 = vector.broadcast %36 : vector<1x1x32xf32> to vector<1x8x32xf32>
    %38 = arith.mulf %30, %37 : vector<1x8x32xf32>
    %cst_24 = arith.constant dense<0.000000e+00> : vector<1x8xf32>
    %39 = vector.multi_reduction <add>, %38, %cst_24 [2] : vector<1x8x32xf32> to vector<1x8xf32>
    %40 = vector.shape_cast %39 : vector<1x8xf32> to vector<1x1x8xf32>
    %41 = vector.shape_cast %23 : vector<1x1xf32> to vector<1x1x1xf32>
    %42 = vector.broadcast %41 : vector<1x1x1xf32> to vector<8x8x1xf32>
    %43 = arith.mulf %8, %42 : vector<8x8x1xf32>
    %cst_25 = arith.constant dense<0.000000e+00> : vector<8x8xf32>
    %44 = vector.multi_reduction <add>, %43, %cst_25 [2] : vector<8x8x1xf32> to vector<8x8xf32>
    %45 = vector.broadcast %26 : vector<1x1xf32> to vector<8x8xf32>
    %46 = arith.addf %44, %45 : vector<8x8xf32>
    %47 = vector.shape_cast %46 : vector<8x8xf32> to vector<1x8x8xf32>
    %48 = vector.broadcast %35 : vector<1x8x1xf32> to vector<1x8x8xf32>
    %49 = vector.broadcast %40 : vector<1x1x8xf32> to vector<1x8x8xf32>
    %50 = arith.addf %48, %49 : vector<1x8x8xf32>
    %51 = arith.addf %50, %47 : vector<1x8x8xf32>
    %cst_26 = arith.constant 0.000000e+00 : f32
    %52 = vector.broadcast %cst_26 : f32 to vector<1x8x8xf32>
    %53 = arith.cmpf ogt, %51, %52 : vector<1x8x8xf32>
    %cst_27 = arith.constant 2.000000e-01 : f32
    %54 = vector.broadcast %cst_27 : f32 to vector<1x8x8xf32>
    %55 = arith.mulf %54, %51 : vector<1x8x8xf32>
    %56 = arith.select %53, %51, %55 : vector<1x8x8xi1>, vector<1x8x8xf32>
    %cst_28 = arith.constant dense<0xFF800000> : vector<1x8xf32>
    %57 = vector.multi_reduction <maximumf>, %56, %cst_28 [2] : vector<1x8x8xf32> to vector<1x8xf32>
    %58 = vector.shape_cast %57 : vector<1x8xf32> to vector<1x8x1xf32>
    %59 = vector.broadcast %58 : vector<1x8x1xf32> to vector<1x8x8xf32>
    %60 = arith.subf %56, %59 : vector<1x8x8xf32>
    %61 = math.exp %60 : vector<1x8x8xf32>
    %cst_29 = arith.constant dense<0.000000e+00> : vector<1x8xf32>
    %62 = vector.multi_reduction <add>, %61, %cst_29 [2] : vector<1x8x8xf32> to vector<1x8xf32>
    %63 = vector.shape_cast %62 : vector<1x8xf32> to vector<1x8x1xf32>
    %64 = tpu.reciprocal %63 {approx = true} : vector<1x8x1xf32> -> vector<1x8x1xf32>
    %65 = vector.broadcast %64 : vector<1x8x1xf32> to vector<1x8x8xf32>
    %66 = arith.mulf %61, %65 : vector<1x8x8xf32>
    "tpu.trace_start"() <{level = 10 : i32, message = "bij,bjh->bih"}> : () -> ()
    %cst_30 = arith.constant dense<0.000000e+00> : vector<1x8x32xf32>
    %67 = tpu.matmul %66, %30, %cst_30 {dimension_numbers = #tpu.dot_dimension_numbers<[2], [1], [1], [2], [0, 0, 0, 1, 1, 2], [0], [0]>} : vector<1x8x8xf32>, vector<1x8x32xf32>, vector<1x8x32xf32> -> vector<1x8x32xf32>
    "tpu.trace_stop"() : () -> ()
    %68 = vector.shape_cast %67 : vector<1x8x32xf32> to vector<8x32xf32>
    %69 = arith.addf %6, %68 : vector<8x32xf32>
    %c1_i32 = arith.constant 1 : i32
    %70 = arith.index_cast %c1_i32 : i32 to index
    %c0_31 = arith.constant 0 : index
    %c0_32 = arith.constant 0 : index
    %71 = vector.load %arg7[%70, %c0_31, %c0_32] : memref<2x32x32xf32, #tpu.memory_space<vmem>>, vector<1x32x32xf32>
    %72 = vector.shape_cast %71 : vector<1x32x32xf32> to vector<32x32xf32>
    %73 = arith.index_cast %c1_i32 : i32 to index
    %c0_33 = arith.constant 0 : index
    %c0_34 = arith.constant 0 : index
    %74 = vector.load %arg8[%73, %c0_33, %c0_34] : memref<2x1x32xf32, #tpu.memory_space<vmem>>, vector<1x1x32xf32>
    %75 = vector.shape_cast %74 : vector<1x1x32xf32> to vector<1x32xf32>
    %76 = arith.index_cast %c1_i32 : i32 to index
    %c0_35 = arith.constant 0 : index
    %c0_36 = arith.constant 0 : index
    %77 = vector.load %arg9[%76, %c0_35, %c0_36] : memref<2x1x32xf32, #tpu.memory_space<vmem>>, vector<1x1x32xf32>
    %78 = vector.shape_cast %77 : vector<1x1x32xf32> to vector<1x32xf32>
    %79 = arith.index_cast %c1_i32 : i32 to index
    %c0_37 = arith.constant 0 : index
    %c0_38 = arith.constant 0 : index
    %80 = vector.load %arg10[%79, %c0_37, %c0_38] : memref<2x1x32xf32, #tpu.memory_space<vmem>>, vector<1x1x32xf32>
    %81 = vector.shape_cast %80 : vector<1x1x32xf32> to vector<1x32xf32>
    %82 = arith.index_cast %c1_i32 : i32 to index
    %c0_39 = arith.constant 0 : index
    %c0_40 = arith.constant 0 : index
    %83 = vector.load %arg5[%82, %c0_39, %c0_40] : memref<2x1x1xf32, #tpu.memory_space<vmem>>, vector<1x1x1xf32>
    %84 = vector.shape_cast %83 : vector<1x1x1xf32> to vector<1x1xf32>
    %85 = arith.index_cast %c1_i32 : i32 to index
    %c0_41 = arith.constant 0 : index
    %c0_42 = arith.constant 0 : index
    %86 = vector.load %arg6[%85, %c0_41, %c0_42] : memref<2x1x1xf32, #tpu.memory_space<vmem>>, vector<1x1x1xf32>
    %87 = vector.shape_cast %86 : vector<1x1x1xf32> to vector<1x1xf32>
    %cst_43 = arith.constant dense<0.000000e+00> : vector<8x32xf32>
    %88 = tpu.matmul %69, %72, %cst_43 {dimension_numbers = #tpu.dot_dimension_numbers<[1], [0], [0], [1], [0, 0, 1, 1], [], []>} : vector<8x32xf32>, vector<32x32xf32>, vector<8x32xf32> -> vector<8x32xf32>
    %89 = vector.broadcast %75 : vector<1x32xf32> to vector<8x32xf32>
    %90 = arith.addf %88, %89 : vector<8x32xf32>
    %91 = vector.shape_cast %90 : vector<8x32xf32> to vector<1x8x32xf32>
    %92 = vector.shape_cast %78 : vector<1x32xf32> to vector<1x1x32xf32>
    %93 = vector.broadcast %92 : vector<1x1x32xf32> to vector<1x8x32xf32>
    %94 = arith.mulf %91, %93 : vector<1x8x32xf32>
    %cst_44 = arith.constant dense<0.000000e+00> : vector<1x8xf32>
    %95 = vector.multi_reduction <add>, %94, %cst_44 [2] : vector<1x8x32xf32> to vector<1x8xf32>
    %96 = vector.shape_cast %95 : vector<1x8xf32> to vector<1x8x1xf32>
    %97 = vector.shape_cast %81 : vector<1x32xf32> to vector<1x1x32xf32>
    %98 = vector.broadcast %97 : vector<1x1x32xf32> to vector<1x8x32xf32>
    %99 = arith.mulf %91, %98 : vector<1x8x32xf32>
    %cst_45 = arith.constant dense<0.000000e+00> : vector<1x8xf32>
    %100 = vector.multi_reduction <add>, %99, %cst_45 [2] : vector<1x8x32xf32> to vector<1x8xf32>
    %101 = vector.shape_cast %100 : vector<1x8xf32> to vector<1x1x8xf32>
    %102 = vector.shape_cast %84 : vector<1x1xf32> to vector<1x1x1xf32>
    %103 = vector.broadcast %102 : vector<1x1x1xf32> to vector<8x8x1xf32>
    %104 = arith.mulf %8, %103 : vector<8x8x1xf32>
    %cst_46 = arith.constant dense<0.000000e+00> : vector<8x8xf32>
    %105 = vector.multi_reduction <add>, %104, %cst_46 [2] : vector<8x8x1xf32> to vector<8x8xf32>
    %106 = vector.broadcast %87 : vector<1x1xf32> to vector<8x8xf32>
    %107 = arith.addf %105, %106 : vector<8x8xf32>
    %108 = vector.shape_cast %107 : vector<8x8xf32> to vector<1x8x8xf32>
    %109 = vector.broadcast %96 : vector<1x8x1xf32> to vector<1x8x8xf32>
    %110 = vector.broadcast %101 : vector<1x1x8xf32> to vector<1x8x8xf32>
    %111 = arith.addf %109, %110 : vector<1x8x8xf32>
    %112 = arith.addf %111, %108 : vector<1x8x8xf32>
    %cst_47 = arith.constant 0.000000e+00 : f32
    %113 = vector.broadcast %cst_47 : f32 to vector<1x8x8xf32>
    %114 = arith.cmpf ogt, %112, %113 : vector<1x8x8xf32>
    %cst_48 = arith.constant 2.000000e-01 : f32
    %115 = vector.broadcast %cst_48 : f32 to vector<1x8x8xf32>
    %116 = arith.mulf %115, %112 : vector<1x8x8xf32>
    %117 = arith.select %114, %112, %116 : vector<1x8x8xi1>, vector<1x8x8xf32>
    %cst_49 = arith.constant dense<0xFF800000> : vector<1x8xf32>
    %118 = vector.multi_reduction <maximumf>, %117, %cst_49 [2] : vector<1x8x8xf32> to vector<1x8xf32>
    %119 = vector.shape_cast %118 : vector<1x8xf32> to vector<1x8x1xf32>
    %120 = vector.broadcast %119 : vector<1x8x1xf32> to vector<1x8x8xf32>
    %121 = arith.subf %117, %120 : vector<1x8x8xf32>
    %122 = math.exp %121 : vector<1x8x8xf32>
    %cst_50 = arith.constant dense<0.000000e+00> : vector<1x8xf32>
    %123 = vector.multi_reduction <add>, %122, %cst_50 [2] : vector<1x8x8xf32> to vector<1x8xf32>
    %124 = vector.shape_cast %123 : vector<1x8xf32> to vector<1x8x1xf32>
    %125 = tpu.reciprocal %124 {approx = true} : vector<1x8x1xf32> -> vector<1x8x1xf32>
    %126 = vector.broadcast %125 : vector<1x8x1xf32> to vector<1x8x8xf32>
    %127 = arith.mulf %122, %126 : vector<1x8x8xf32>
    "tpu.trace_start"() <{level = 10 : i32, message = "bij,bjh->bih"}> : () -> ()
    %cst_51 = arith.constant dense<0.000000e+00> : vector<1x8x32xf32>
    %128 = tpu.matmul %127, %91, %cst_51 {dimension_numbers = #tpu.dot_dimension_numbers<[2], [1], [1], [2], [0, 0, 0, 1, 1, 2], [0], [0]>} : vector<1x8x8xf32>, vector<1x8x32xf32>, vector<1x8x32xf32> -> vector<1x8x32xf32>
    "tpu.trace_stop"() : () -> ()
    %129 = vector.shape_cast %128 : vector<1x8x32xf32> to vector<8x32xf32>
    %130 = arith.addf %69, %129 : vector<8x32xf32>
    %c2_i32 = arith.constant 2 : i32
    %131 = vector.shape_cast %130 : vector<8x32xf32> to vector<1x8x32xf32>
    %c0_52 = arith.constant 0 : index
    %c0_53 = arith.constant 0 : index
    %c0_54 = arith.constant 0 : index
    %132 = vector.load %arg11[%c0_52, %c0_53, %c0_54] : memref<1x8x32xf32, #tpu.memory_space<vmem>>, vector<1x8x32xf32>
    tpu.vector_store %arg11[%c0_52, %c0_53, %c0_54], %131 {strides = array<i32>} : memref<1x8x32xf32, #tpu.memory_space<vmem>>, vector<1x8x32xf32>,
    return
  }
  func.func @transform_0(%arg0: i32) -> (i32, i32, i32) {
    %c0_i32 = arith.constant 0 : i32
    %c0_i32_0 = arith.constant 0 : i32
    %c0_i32_1 = arith.constant 0 : i32
    return %arg0, %c0_i32, %c0_i32_0 : i32, i32, i32
  }
  func.func @transform_1(%arg0: i32) -> (i32, i32, i32, i32) {
    %c0_i32 = arith.constant 0 : i32
    %c0_i32_0 = arith.constant 0 : i32
    %c0_i32_1 = arith.constant 0 : i32
    %c0_i32_2 = arith.constant 0 : i32
    return %arg0, %c0_i32, %c0_i32_0, %c0_i32_1 : i32, i32, i32, i32
  }
  func.func @transform_2(%arg0: i32) -> (i32, i32) {
    %c0_i32 = arith.constant 0 : i32
    %c0_i32_0 = arith.constant 0 : i32
    %c0_i32_1 = arith.constant 0 : i32
    return %c0_i32, %c0_i32_0 : i32, i32
  }
  func.func @transform_3(%arg0: i32) -> (i32, i32) {
    %c0_i32 = arith.constant 0 : i32
    %c0_i32_0 = arith.constant 0 : i32
    %c0_i32_1 = arith.constant 0 : i32
    return %c0_i32, %c0_i32_0 : i32, i32
  }
  func.func @transform_4(%arg0: i32) -> (i32, i32, i32) {
    %c0_i32 = arith.constant 0 : i32
    %c0_i32_0 = arith.constant 0 : i32
    %c0_i32_1 = arith.constant 0 : i32
    %c0_i32_2 = arith.constant 0 : i32
    return %c0_i32, %c0_i32_0, %c0_i32_1 : i32, i32, i32
  }
  func.func @transform_5(%arg0: i32) -> (i32, i32, i32) {
    %c0_i32 = arith.constant 0 : i32
    %c0_i32_0 = arith.constant 0 : i32
    %c0_i32_1 = arith.constant 0 : i32
    %c0_i32_2 = arith.constant 0 : i32
    return %c0_i32, %c0_i32_0, %c0_i32_1 : i32, i32, i32
  }
  func.func @transform_6(%arg0: i32) -> (i32, i32, i32) {
    %c0_i32 = arith.constant 0 : i32
    %c0_i32_0 = arith.constant 0 : i32
    %c0_i32_1 = arith.constant 0 : i32
    %c0_i32_2 = arith.constant 0 : i32
    return %c0_i32, %c0_i32_0, %c0_i32_1 : i32, i32, i32
  }
  func.func @transform_7(%arg0: i32) -> (i32, i32, i32) {
    %c0_i32 = arith.constant 0 : i32
    %c0_i32_0 = arith.constant 0 : i32
    %c0_i32_1 = arith.constant 0 : i32
    %c0_i32_2 = arith.constant 0 : i32
    return %c0_i32, %c0_i32_0, %c0_i32_1 : i32, i32, i32
  }
  func.func @transform_8(%arg0: i32) -> (i32, i32, i32) {
    %c0_i32 = arith.constant 0 : i32
    %c0_i32_0 = arith.constant 0 : i32
    %c0_i32_1 = arith.constant 0 : i32
    %c0_i32_2 = arith.constant 0 : i32
    return %c0_i32, %c0_i32_0, %c0_i32_1 : i32, i32, i32
  }
  func.func @transform_9(%arg0: i32) -> (i32, i32, i32) {
    %c0_i32 = arith.constant 0 : i32
    %c0_i32_0 = arith.constant 0 : i32
    %c0_i32_1 = arith.constant 0 : i32
    %c0_i32_2 = arith.constant 0 : i32
    return %c0_i32, %c0_i32_0, %c0_i32_1 : i32, i32, i32
  }
  func.func @transform_10(%arg0: i32) -> (i32, i32, i32) {
    %c0_i32 = arith.constant 0 : i32
    %c0_i32_0 = arith.constant 0 : i32
    %c0_i32_1 = arith.constant 0 : i32
    return %arg0, %c0_i32, %c0_i32_0 : i32, i32, i32
  }
}

</mosaic_0001>

<llo_original>
// kernel: tpu_custom_call.1
$region0: #{tpu_custom_call.1}
  #allocation0 [shape = 'u32[]', space=smem, size = 0x4, offset = 0x4, fixed_abs, tag = 'smem constant byte address 0x4 - core index']
  #allocation1 [shape = 'u32[72,128]{1,0:T(1,128)}', space=vmem, size = 0x9000, scoped, tag = 'internal scratch']
  %s0 = inlined_call_operand.vmem [shape: f32[2,8,3], index: 0, kind: input, shape index: {}]
  %s1 = inlined_call_operand.vmem [shape: f32[2,8,8,1], index: 1, kind: input, shape index: {}]
  %s2 = inlined_call_operand.vmem [shape: f32[3,32], index: 2, kind: input, shape index: {}]
  %s3 = inlined_call_operand.vmem [shape: f32[1,32], index: 3, kind: input, shape index: {}]
  %s4 = inlined_call_operand.vmem [shape: f32[2,1,1], index: 4, kind: input, shape index: {}]
  %s5 = inlined_call_operand.vmem [shape: f32[2,1,1], index: 5, kind: input, shape index: {}]
  %s6 = inlined_call_operand.vmem [shape: f32[2,32,32], index: 6, kind: input, shape index: {}]
  %s7 = inlined_call_operand.vmem [shape: f32[2,1,32], index: 7, kind: input, shape index: {}]
  %s8 = inlined_call_operand.vmem [shape: f32[2,1,32], index: 8, kind: input, shape index: {}]
  %s9 = inlined_call_operand.vmem [shape: f32[2,1,32], index: 9, kind: input, shape index: {}]
  %s10 = inlined_call_operand.hbm [shape: f32[2,8,32], index: 10, kind: output, shape index: {}]
  %s11 = sld [smem:[#allocation0]]
  $region73: #{tpu_custom_call.1} parent=0
    _
  %s13 = ssub.s32 1, %s11
  %s14 = scalar_select 0, %s13, %s11
  $region1: #{tpu_custom_call.1} parent=0
    #allocation2 [shape = 'u8[8192]{0}', space=vmem, size = 0x2000, scoped, tag = 'output window, operand 0']
    #allocation3 [shape = 's32[2]{0}', space=sflag, size = 0x8, scoped, tag = 'scoped memory for tpu_custom_call.1']
    %15 = vsyncpa [#allocation3], 0
    %s16 = scalar_lea.sflag [#allocation3], 1
    %17 = vsyncpa %s16, 0
    loop: start=0, step=1, limit=4
    $region2: #{tpu_custom_call.1} parent=1 // loop_pre_header
      _
    $region3: #{tpu_custom_call.1} parent=1 // loop_header
      %s19 = sphi 0, %s23
      %p20 = scmp.ge.s32.totalorder %s19, 4
      %s29 = sphi 0, %s31
      %s32 = sphi 0, %s29
      %s33 = sphi 0, %s32
      %s49 = sphi 0, %s33
      %s55 = sphi 0, %s57
      %s58 = sphi 0, %s55
      %s59 = sphi 0, %s58
      %s75 = sphi 0, %s59
      %s79 = sphi 0, %s79
      %s81 = sphi 0, %s79
      %s82 = sphi 0, %s81
      %s96 = sphi 0, %s82
      %s100 = sphi 0, %s100
      %s102 = sphi 0, %s100
      %s103 = sphi 0, %s102
      %s117 = sphi 0, %s103
      %s121 = sphi 0, %s121
      %s123 = sphi 0, %s121
      %s124 = sphi 0, %s123
      %s138 = sphi 0, %s124
      %s142 = sphi 0, %s142
      %s144 = sphi 0, %s142
      %s145 = sphi 0, %s144
      %s159 = sphi 0, %s145
      %s163 = sphi 0, %s163
      %s165 = sphi 0, %s163
      %s166 = sphi 0, %s165
      %s180 = sphi 0, %s166
      %s184 = sphi 0, %s184
      %s186 = sphi 0, %s184
      %s187 = sphi 0, %s186
      %s201 = sphi 0, %s187
      %s205 = sphi 0, %s205
      %s207 = sphi 0, %s205
      %s208 = sphi 0, %s207
      %s222 = sphi 0, %s208
      %s226 = sphi 0, %s226
      %s228 = sphi 0, %s226
      %s229 = sphi 0, %s228
      %s243 = sphi 0, %s229
      %s249 = sphi 0, %s251
      %s252 = sphi 0, %s249
      %s253 = sphi 0, %s252
      %s269 = sphi 0, %s253
    $region4: #{tpu_custom_call.1} parent=1 // loop_header_branch
      %22 = sbr.rel (%p20) target = $region8
    $region5: #{tpu_custom_call.1} parent=1 // loop_body
      %s24 = ssub.s32 %s19, 1
      %s25 = ssub.s32 %s19, 2
      %s26 = sadd.s32 %s19, 1
      %s27 = ssub.s32 %s19, %s26
      %p28 = scmp.eq.s32.totalorder %s27, 0
      %s30 = sadd.s32 %s29, 1
      %s31 = scalar_select %p28, %s29, %s30
      %p34 = pneg %p28
      %p35 = scmp.eq.s32.totalorder %s19, 1
      %p36 = por %p34, %p35
      %p37 = scmp.ne.s32.totalorder %s29, %s32
      %p38 = scmp.eq.s32.totalorder %s19, 0
      %p39 = por %p37, %p38
      %p40 = scmp.ne.s32.totalorder %s29, %s32
      %p41 = scmp.eq.s32.totalorder %s24, 1
      %p42 = por %p40, %p41
      %p43 = scmp.ne.s32.totalorder %s32, %s33
      %p44 = scmp.eq.s32.totalorder %s24, 0
      %p45 = por %p43, %p44
      %p46 = scmp.ne.s32.totalorder %s32, %s33
      %p47 = scmp.eq.s32.totalorder %s25, 1
      %p48 = por %p46, %p47
      %p50 = scmp.ne.s32.totalorder %s33, %s49
      %p51 = scmp.eq.s32.totalorder %s25, 0
      %p52 = por %p50, %p51
      %s53 = ssub.s32 %s19, %s26
      %p54 = scmp.eq.s32.totalorder %s53, 0
      %s56 = sadd.s32 %s55, 1
      %s57 = scalar_select %p54, %s55, %s56
      %p60 = pneg %p54
      %p61 = scmp.eq.s32.totalorder %s19, 1
      %p62 = por %p60, %p61
      %p63 = scmp.ne.s32.totalorder %s55, %s58
      %p64 = scmp.eq.s32.totalorder %s19, 0
      %p65 = por %p63, %p64
      %p66 = scmp.ne.s32.totalorder %s55, %s58
      %p67 = scmp.eq.s32.totalorder %s24, 1
      %p68 = por %p66, %p67
      %p69 = scmp.ne.s32.totalorder %s58, %s59
      %p70 = scmp.eq.s32.totalorder %s24, 0
      %p71 = por %p69, %p70
      %p72 = scmp.ne.s32.totalorder %s58, %s59
      %p73 = scmp.eq.s32.totalorder %s25, 1
      %p74 = por %p72, %p73
      %p76 = scmp.ne.s32.totalorder %s59, %s75
      %p77 = scmp.eq.s32.totalorder %s25, 0
      %p78 = por %p76, %p77
      %s80 = sadd.s32 %s79, 1
      %p83 = scmp.eq.s32.totalorder %s19, 1
      %p84 = scmp.ne.s32.totalorder %s79, %s81
      %p85 = scmp.eq.s32.totalorder %s19, 0
      %p86 = por %p84, %p85
      %p87 = scmp.ne.s32.totalorder %s79, %s81
      %p88 = scmp.eq.s32.totalorder %s24, 1
      %p89 = por %p87, %p88
      %p90 = scmp.ne.s32.totalorder %s81, %s82
      %p91 = scmp.eq.s32.totalorder %s24, 0
      %p92 = por %p90, %p91
      %p93 = scmp.ne.s32.totalorder %s81, %s82
      %p94 = scmp.eq.s32.totalorder %s25, 1
      %p95 = por %p93, %p94
      %p97 = scmp.ne.s32.totalorder %s82, %s96
      %p98 = scmp.eq.s32.totalorder %s25, 0
      %p99 = por %p97, %p98
      %s101 = sadd.s32 %s100, 1
      %p104 = scmp.eq.s32.totalorder %s19, 1
      %p105 = scmp.ne.s32.totalorder %s100, %s102
      %p106 = scmp.eq.s32.totalorder %s19, 0
      %p107 = por %p105, %p106
      %p108 = scmp.ne.s32.totalorder %s100, %s102
      %p109 = scmp.eq.s32.totalorder %s24, 1
      %p110 = por %p108, %p109
      %p111 = scmp.ne.s32.totalorder %s102, %s103
      %p112 = scmp.eq.s32.totalorder %s24, 0
      %p113 = por %p111, %p112
      %p114 = scmp.ne.s32.totalorder %s102, %s103
      %p115 = scmp.eq.s32.totalorder %s25, 1
      %p116 = por %p114, %p115
      %p118 = scmp.ne.s32.totalorder %s103, %s117
      %p119 = scmp.eq.s32.totalorder %s25, 0
      %p120 = por %p118, %p119
      %s122 = sadd.s32 %s121, 1
      %p125 = scmp.eq.s32.totalorder %s19, 1
      %p126 = scmp.ne.s32.totalorder %s121, %s123
      %p127 = scmp.eq.s32.totalorder %s19, 0
      %p128 = por %p126, %p127
      %p129 = scmp.ne.s32.totalorder %s121, %s123
      %p130 = scmp.eq.s32.totalorder %s24, 1
      %p131 = por %p129, %p130
      %p132 = scmp.ne.s32.totalorder %s123, %s124
      %p133 = scmp.eq.s32.totalorder %s24, 0
      %p134 = por %p132, %p133
      %p135 = scmp.ne.s32.totalorder %s123, %s124
      %p136 = scmp.eq.s32.totalorder %s25, 1
      %p137 = por %p135, %p136
      %p139 = scmp.ne.s32.totalorder %s124, %s138
      %p140 = scmp.eq.s32.totalorder %s25, 0
      %p141 = por %p139, %p140
      %s143 = sadd.s32 %s142, 1
      %p146 = scmp.eq.s32.totalorder %s19, 1
      %p147 = scmp.ne.s32.totalorder %s142, %s144
      %p148 = scmp.eq.s32.totalorder %s19, 0
      %p149 = por %p147, %p148
      %p150 = scmp.ne.s32.totalorder %s142, %s144
      %p151 = scmp.eq.s32.totalorder %s24, 1
      %p152 = por %p150, %p151
      %p153 = scmp.ne.s32.totalorder %s144, %s145
      %p154 = scmp.eq.s32.totalorder %s24, 0
      %p155 = por %p153, %p154
      %p156 = scmp.ne.s32.totalorder %s144, %s145
      %p157 = scmp.eq.s32.totalorder %s25, 1
      %p158 = por %p156, %p157
      %p160 = scmp.ne.s32.totalorder %s145, %s159
      %p161 = scmp.eq.s32.totalorder %s25, 0
      %p162 = por %p160, %p161
      %s164 = sadd.s32 %s163, 1
      %p167 = scmp.eq.s32.totalorder %s19, 1
      %p168 = scmp.ne.s32.totalorder %s163, %s165
      %p169 = scmp.eq.s32.totalorder %s19, 0
      %p170 = por %p168, %p169
      %p171 = scmp.ne.s32.totalorder %s163, %s165
      %p172 = scmp.eq.s32.totalorder %s24, 1
      %p173 = por %p171, %p172
      %p174 = scmp.ne.s32.totalorder %s165, %s166
      %p175 = scmp.eq.s32.totalorder %s24, 0
      %p176 = por %p174, %p175
      %p177 = scmp.ne.s32.totalorder %s165, %s166
      %p178 = scmp.eq.s32.totalorder %s25, 1
      %p179 = por %p177, %p178
      %p181 = scmp.ne.s32.totalorder %s166, %s180
      %p182 = scmp.eq.s32.totalorder %s25, 0
      %p183 = por %p181, %p182
      %s185 = sadd.s32 %s184, 1
      %p188 = scmp.eq.s32.totalorder %s19, 1
      %p189 = scmp.ne.s32.totalorder %s184, %s186
      %p190 = scmp.eq.s32.totalorder %s19, 0
      %p191 = por %p189, %p190
      %p192 = scmp.ne.s32.totalorder %s184, %s186
      %p193 = scmp.eq.s32.totalorder %s24, 1
      %p194 = por %p192, %p193
      %p195 = scmp.ne.s32.totalorder %s186, %s187
      %p196 = scmp.eq.s32.totalorder %s24, 0
      %p197 = por %p195, %p196
      %p198 = scmp.ne.s32.totalorder %s186, %s187
      %p199 = scmp.eq.s32.totalorder %s25, 1
      %p200 = por %p198, %p199
      %p202 = scmp.ne.s32.totalorder %s187, %s201
      %p203 = scmp.eq.s32.totalorder %s25, 0
      %p204 = por %p202, %p203
      %s206 = sadd.s32 %s205, 1
      %p209 = scmp.eq.s32.totalorder %s19, 1
      %p210 = scmp.ne.s32.totalorder %s205, %s207
      %p211 = scmp.eq.s32.totalorder %s19, 0
      %p212 = por %p210, %p211
      %p213 = scmp.ne.s32.totalorder %s205, %s207
      %p214 = scmp.eq.s32.totalorder %s24, 1
      %p215 = por %p213, %p214
      %p216 = scmp.ne.s32.totalorder %s207, %s208
      %p217 = scmp.eq.s32.totalorder %s24, 0
      %p218 = por %p216, %p217
      %p219 = scmp.ne.s32.totalorder %s207, %s208
      %p220 = scmp.eq.s32.totalorder %s25, 1
      %p221 = por %p219, %p220
      %p223 = scmp.ne.s32.totalorder %s208, %s222
      %p224 = scmp.eq.s32.totalorder %s25, 0
      %p225 = por %p223, %p224
      %s227 = sadd.s32 %s226, 1
      %p230 = scmp.eq.s32.totalorder %s19, 1
      %p231 = scmp.ne.s32.totalorder %s226, %s228
      %p232 = scmp.eq.s32.totalorder %s19, 0
      %p233 = por %p231, %p232
      %p234 = scmp.ne.s32.totalorder %s226, %s228
      %p235 = scmp.eq.s32.totalorder %s24, 1
      %p236 = por %p234, %p235
      %p237 = scmp.ne.s32.totalorder %s228, %s229
      %p238 = scmp.eq.s32.totalorder %s24, 0
      %p239 = por %p237, %p238
      %p240 = scmp.ne.s32.totalorder %s228, %s229
      %p241 = scmp.eq.s32.totalorder %s25, 1
      %p242 = por %p240, %p241
      %p244 = scmp.ne.s32.totalorder %s229, %s243
      %p245 = scmp.eq.s32.totalorder %s25, 0
      %p246 = por %p244, %p245
      %s247 = ssub.s32 %s19, %s26
      %p248 = scmp.eq.s32.totalorder %s247, 0
      %s250 = sadd.s32 %s249, 1
      %s251 = scalar_select %p248, %s249, %s250
      %p254 = pneg %p248
      %p255 = scmp.eq.s32.totalorder %s19, 1
      %p256 = por %p254, %p255
      %p257 = scmp.ne.s32.totalorder %s249, %s252
      %p258 = scmp.eq.s32.totalorder %s19, 0
      %p259 = por %p257, %p258
      %p260 = scmp.ne.s32.totalorder %s249, %s252
      %p261 = scmp.eq.s32.totalorder %s24, 1
      %p262 = por %p260, %p261
      %p263 = scmp.ne.s32.totalorder %s252, %s253
      %p264 = scmp.eq.s32.totalorder %s24, 0
      %p265 = por %p263, %p264
      %p266 = scmp.ne.s32.totalorder %s252, %s253
      %p267 = scmp.eq.s32.totalorder %s25, 1
      %p268 = por %p266, %p267
      %p270 = scmp.ne.s32.totalorder %s253, %s269
      %p271 = scmp.eq.s32.totalorder %s25, 0
      %p272 = por %p270, %p271
      %p273 = scmp.le.s32.totalorder 1, %s19
      %p274 = scmp.lt.s32.totalorder %s19, 3
      %p275 = pnand %p273, %p274
      %p276 = pneg %p275
      // Predicated region
      $region9: #{tpu_custom_call.1} parent=5 // pred_check
        _
      $region10: #{tpu_custom_call.1} parent=5 // pred_check_branch
        %278 = sbr.rel (%p275) target = $region12
      $region11: #{tpu_custom_call.1} parent=5 // pred_region
        %s279 = ssub.s32 %s19, 1
        // Predicated region
        $region13: #{tpu_custom_call.1} parent=11 // pred_check
          %p280 = pneg %p92
        $region14: #{tpu_custom_call.1} parent=11 // pred_check_branch
          %282 = sbr.rel (%p280) target = $region16
        $region15: #{tpu_custom_call.1} parent=11 // pred_region
          _
        $region16: #{tpu_custom_call.1} parent=11 // pred_fallthru
          _
        // Predicated region
        $region17: #{tpu_custom_call.1} parent=11 // pred_check
          %p283 = pneg %p113
        $region18: #{tpu_custom_call.1} parent=11 // pred_check_branch
          %285 = sbr.rel (%p283) target = $region20
        $region19: #{tpu_custom_call.1} parent=11 // pred_region
          _
        $region20: #{tpu_custom_call.1} parent=11 // pred_fallthru
          _
        // Predicated region
        $region21: #{tpu_custom_call.1} parent=11 // pred_check
          %p286 = pneg %p134
        $region22: #{tpu_custom_call.1} parent=11 // pred_check_branch
          %288 = sbr.rel (%p286) target = $region24
        $region23: #{tpu_custom_call.1} parent=11 // pred_region
          _
        $region24: #{tpu_custom_call.1} parent=11 // pred_fallthru
          _
        // Predicated region
        $region25: #{tpu_custom_call.1} parent=11 // pred_check
          %p289 = pneg %p155
        $region26: #{tpu_custom_call.1} parent=11 // pred_check_branch
          %291 = sbr.rel (%p289) target = $region28
        $region27: #{tpu_custom_call.1} parent=11 // pred_region
          _
        $region28: #{tpu_custom_call.1} parent=11 // pred_fallthru
          _
        // Predicated region
        $region29: #{tpu_custom_call.1} parent=11 // pred_check
          %p292 = pneg %p176
        $region30: #{tpu_custom_call.1} parent=11 // pred_check_branch
          %294 = sbr.rel (%p292) target = $region32
        $region31: #{tpu_custom_call.1} parent=11 // pred_region
          _
        $region32: #{tpu_custom_call.1} parent=11 // pred_fallthru
          _
        // Predicated region
        $region33: #{tpu_custom_call.1} parent=11 // pred_check
          %p295 = pneg %p197
        $region34: #{tpu_custom_call.1} parent=11 // pred_check_branch
          %297 = sbr.rel (%p295) target = $region36
        $region35: #{tpu_custom_call.1} parent=11 // pred_region
          _
        $region36: #{tpu_custom_call.1} parent=11 // pred_fallthru
          _
        // Predicated region
        $region37: #{tpu_custom_call.1} parent=11 // pred_check
          %p298 = pneg %p218
        $region38: #{tpu_custom_call.1} parent=11 // pred_check_branch
          %300 = sbr.rel (%p298) target = $region40
        $region39: #{tpu_custom_call.1} parent=11 // pred_region
          _
        $region40: #{tpu_custom_call.1} parent=11 // pred_fallthru
          _
        // Predicated region
        $region41: #{tpu_custom_call.1} parent=11 // pred_check
          %p301 = pneg %p239
        $region42: #{tpu_custom_call.1} parent=11 // pred_check_branch
          %303 = sbr.rel (%p301) target = $region44
        $region43: #{tpu_custom_call.1} parent=11 // pred_region
          _
        $region44: #{tpu_custom_call.1} parent=11 // pred_fallthru
          _
      $region12: #{tpu_custom_call.1} parent=5 // pred_fallthru
        _
      %p304 = scmp.lt.s32.totalorder %s19, 2
      // Predicated region
      $region45: #{tpu_custom_call.1} parent=5 // pred_check
        %p305 = pneg %p304
      $region46: #{tpu_custom_call.1} parent=5 // pred_check_branch
        %307 = sbr.rel (%p305) target = $region48
      $region47: #{tpu_custom_call.1} parent=5 // pred_region
        // Predicated region
        $region49: #{tpu_custom_call.1} parent=47 // pred_check
          %p308 = pneg %p39
        $region50: #{tpu_custom_call.1} parent=47 // pred_check_branch
          %310 = sbr.rel (%p308) target = $region52
        $region51: #{tpu_custom_call.1} parent=47 // pred_region
          %p311 = scmp.lt.s32.totalorder %s19, 1
          %s312 = scalar_select %p311, %s19, 1
          %s313 = smul.addr %s312, 8
          %s314 = scalar_lea.vmem %s0, %s313
        $region52: #{tpu_custom_call.1} parent=47 // pred_fallthru
          _
        // Predicated region
        $region53: #{tpu_custom_call.1} parent=47 // pred_check
          %p315 = pneg %p65
        $region54: #{tpu_custom_call.1} parent=47 // pred_check_branch
          %317 = sbr.rel (%p315) target = $region56
        $region55: #{tpu_custom_call.1} parent=47 // pred_region
          %p318 = scmp.lt.s32.totalorder %s19, 1
          %s319 = scalar_select %p318, %s19, 1
          %s320 = smul.addr %s319, 8
          %s321 = smul.addr %s320, 8
          %s322 = scalar_lea.vmem %s1, %s321
        $region56: #{tpu_custom_call.1} parent=47 // pred_fallthru
          _
      $region48: #{tpu_custom_call.1} parent=5 // pred_fallthru
        _
      %p323 = scmp.le.s32.totalorder 1, %s19
      %p324 = scmp.lt.s32.totalorder %s19, 3
      %p325 = pnand %p323, %p324
      %p326 = pneg %p325
      // Predicated region
      $region57: #{tpu_custom_call.1} parent=5 // pred_check
        _
      $region58: #{tpu_custom_call.1} parent=5 // pred_check_branch
        %328 = sbr.rel (%p325) target = $region60
      $region59: #{tpu_custom_call.1} parent=5 // pred_region
        %s329 = ssub.s32 %s19, 1
        %p330 = scmp.lt.s32.totalorder %s24, 1
        %s331 = scalar_select %p330, %s24, 1
        %s332 = smul.addr %s331, 8
        %s333 = scalar_lea.vmem %s0, %s332
        %p334 = pneg %p45
        %p335 = pneg %p42
        %p336 = scmp.lt.s32.totalorder %s24, 1
        %s337 = scalar_select %p336, %s24, 1
        %s338 = smul.addr %s337, 8
        %s339 = smul.addr %s338, 8
        %s340 = scalar_lea.vmem %s1, %s339
        %p341 = pneg %p71
        %p342 = pneg %p68
        %p343 = pneg %p92
        %p344 = pneg %p89
        %p345 = pneg %p113
        %p346 = pneg %p110
        %p347 = pneg %p134
        %p348 = pneg %p131
        %p349 = pneg %p155
        %p350 = pneg %p152
        %p351 = pneg %p176
        %p352 = pneg %p173
        %p353 = pneg %p197
        %p354 = pneg %p194
        %p355 = pneg %p218
        %p356 = pneg %p215
        %p357 = pneg %p239
        %p358 = pneg %p236
        %p359 = pneg %p265
        %p360 = pneg %p262
        %s361 = sand.u32 %s252, 1
        %s362 = scalar_lea.sflag [#allocation3], %s361
        %s363 = sand.u32 %s252, 1
        %s364 = smul.addr %s363, 8
        %s365 = scalar_lea.vmem [#allocation2], %s364
        %p366 = scmp.lt.s32.totalorder %s24, 1
        %s367 = scalar_select %p366, %s24, 1
        %s368 = smul.addr %s367, 8
        %s369 = scalar_lea.vmem %s0, %s368
        %p370 = scmp.lt.s32.totalorder %s24, 1
        %s371 = scalar_select %p370, %s24, 1
        %s372 = smul.addr %s371, 8
        %s373 = smul.addr %s372, 8
        %s374 = scalar_lea.vmem %s1, %s373
        %v375 = vld [vmem:[%s369] sm:$0xff]
        %v376 = vld [vmem:[%s2] sm:$0x7]
        %v377 = vld [vmem:[%s3] sm:$0x1]
        %v379 = vperm.slane %v377, 0
        %vm381 = vcmask 23552
        %v383 = vsel %vm381, %v375, 0
        %vm385 = vcmask 1042432
        %v387 = vsel %vm385, %v376, 0
        %389 = vmatpush.msra.mxu0 0.0
        %390 = vmatpush.msra.mxu0 0.0
        %391 = vmatpush.msra.mxu0 0.0
        %392 = vmatpush.msra.mxu0 0.0
        %393 = vmatpush.msra.mxu0 0.0
        %394 = vmatpush.msra.mxu0 0.0
        %395 = vmatpush.msra.mxu0 0.0
        %396 = vmatpush.msra.mxu0 0.0
        %397 = vmatpush.msra.mxu0 0.0
        %398 = vmatpush.msra.mxu0 0.0
        %399 = vmatpush.msra.mxu0 0.0
        %400 = vmatpush.msra.mxu0 0.0
        %401 = vmatpush.msra.mxu0 0.0
        %402 = vmatpush.msra.mxu0 0.0
        %403 = vmatpush.msra.mxu0 0.0
        %404 = vmatpush.msra.mxu0 %v387
        %405 = vmatmul.f32.gmra.mxu0 %v383
        %v406 = vpop.f32.mrf.mxu0
        %v407 = vadd.f32 %v379, %v406
        %408 = vdwg.mxu0
        %v409 = vld [vmem:[%s374] sm:$0xff]
        %v410 = vld [vmem:[%s374 + $0x8] sm:$0xff]
        %v411 = vld [vmem:[%s374 + $0x10] sm:$0xff]
        %v412 = vld [vmem:[%s374 + $0x18] sm:$0xff]
        %v413 = vld [vmem:[%s374 + $0x20] sm:$0xff]
        %v414 = vld [vmem:[%s374 + $0x28] sm:$0xff]
        %v415 = vld [vmem:[%s374 + $0x30] sm:$0xff]
        %v416 = vld [vmem:[%s374 + $0x38] sm:$0xff]
        %v417 = vld [vmem:[%s6] sm:$0xff]
        %v418 = vld [vmem:[%s6 + $0x8] sm:$0xff]
        %v419 = vld [vmem:[%s6 + $0x10] sm:$0xff]
        %v420 = vld [vmem:[%s6 + $0x18] sm:$0xff]
        %v421 = vld [vmem:[%s7] sm:$0x1]
        %v422 = vld [vmem:[%s8] sm:$0x1]
        %v423 = vld [vmem:[%s9] sm:$0x1]
        %v424 = vld [vmem:[%s4] sm:$0x1]
        %v425 = vld [vmem:[%s5] sm:$0x1]
        %v427 = vperm.slane %v421, 0
        %vm429 = vcmask 261120
        %v431 = vsel %vm429, %v407, 0
        %433 = vmatpush.msra.mxu0 0.0
        %434 = vmatpush.msra.mxu0 0.0
        %435 = vmatpush.msra.mxu0 0.0
        %436 = vmatpush.msra.mxu0 0.0
        %437 = vmatpush.msra.mxu0 0.0
        %438 = vmatpush.msra.mxu0 0.0
        %439 = vmatpush.msra.mxu0 0.0
        %440 = vmatpush.msra.mxu0 0.0
        %441 = vmatpush.msra.mxu0 0.0
        %442 = vmatpush.msra.mxu0 0.0
        %443 = vmatpush.msra.mxu0 0.0
        %444 = vmatpush.msra.mxu0 0.0
        %445 = vmatpush.msra.mxu0 %v420
        %446 = vmatpush.msra.mxu0 %v419
        %447 = vmatpush.msra.mxu0 %v418
        %448 = vmatpush.msra.mxu0 %v417
        %449 = vmatmul.f32.gmra.mxu0 %v431
        %v450 = vpop.f32.mrf.mxu0
        %v451 = vadd.f32 %v427, %v450
        %452 = vdwg.mxu0
        %v454 = vperm.slane %v422, 0
        %v456 = vmul.f32 %v451, %v454
        %v457 = vsel %vm429, %v456, 0.0
        %458 = vadd.xlane.f32.xlu0 %v457
        %v459 = vpop.xlane.xlu0 %458
        %v461 = vperm.slane %v423, 0
        %v463 = vmul.f32 %v451, %v461
        %v464 = vsel %vm429, %v463, 0.0
        %465 = vadd.xlane.f32.xlu0 %v464
        %v466 = vpop.xlane.xlu0 %465
        %v468 = vperm.slane %v424, 0
        %v470 = vmul.f32 %v409, %v468
        %v471 = vmul.f32 %v410, %v468
        %v472 = vmul.f32 %v411, %v468
        %v473 = vmul.f32 %v412, %v468
        %v474 = vmul.f32 %v413, %v468
        %v475 = vmul.f32 %v414, %v468
        %v476 = vmul.f32 %v415, %v468
        %v477 = vmul.f32 %v416, %v468
        %v478 = vadd.f32 %v470, 0.0
        %v479 = vadd.f32 %v471, 0.0
        %v480 = vadd.f32 %v472, 0.0
        %v481 = vadd.f32 %v473, 0.0
        %v482 = vadd.f32 %v474, 0.0
        %v483 = vadd.f32 %v475, 0.0
        %v484 = vadd.f32 %v476, 0.0
        %v485 = vadd.f32 %v477, 0.0
        %v487 = vperm.slane %v425, 0
        %488 = vset.pattern.permute.xlu0 0
        %489 = vperm.xlu0 %488, %v487
        %v490 = vpop.permute.xlu0 %489
        %v492 = vadd.f32 %v478, %v490
        %v493 = vadd.f32 %v479, %v490
        %v494 = vadd.f32 %v480, %v490
        %v495 = vadd.f32 %v481, %v490
        %v496 = vadd.f32 %v482, %v490
        %v497 = vadd.f32 %v483, %v490
        %v498 = vadd.f32 %v484, %v490
        %v499 = vadd.f32 %v485, %v490
        %v501 = vlaneseq
        %v502 = vand.u32 %v501, 127
        %v503 = vperm.slane %v466, %v502
        %vm504 = vcmask 1041409
        %vm505 = vcmask 1042434
        %v506 = vsel %vm505, %v503, %v503
        %vm507 = vcmask 1043459
        %v508 = vsel %vm507, %v503, %v506
        %vm509 = vcmask 1044484
        %v510 = vsel %vm509, %v503, %v508
        %vm511 = vcmask 1045509
        %v512 = vsel %vm511, %v503, %v510
        %vm513 = vcmask 1046534
        %v514 = vsel %vm513, %v503, %v512
        %vm515 = vcmask 1047559
        %v516 = vsel %vm515, %v503, %v514
        %v518 = vadd.f32 %v459, %v516
        %527 = vset.pattern.permute.xlu0 0
        %528 = vperm.xlu0 %527, %v492
        %v529 = vpop.permute.xlu0 %528
        %530 = vset.pattern.permute.xlu0 0
        %531 = vperm.xlu0 %530, %v493
        %v532 = vpop.permute.xlu0 %531
        %533 = vset.pattern.permute.xlu0 0
        %534 = vperm.xlu0 %533, %v494
        %v535 = vpop.permute.xlu0 %534
        %536 = vset.pattern.permute.xlu0 0
        %537 = vperm.xlu0 %536, %v495
        %v538 = vpop.permute.xlu0 %537
        %539 = vset.pattern.permute.xlu0 0
        %540 = vperm.xlu0 %539, %v496
        %v541 = vpop.permute.xlu0 %540
        %542 = vset.pattern.permute.xlu0 0
        %543 = vperm.xlu0 %542, %v497
        %v544 = vpop.permute.xlu0 %543
        %545 = vset.pattern.permute.xlu0 0
        %546 = vperm.xlu0 %545, %v498
        %v547 = vpop.permute.xlu0 %546
        %548 = vset.pattern.permute.xlu0 0
        %549 = vperm.xlu0 %548, %v499
        %v550 = vpop.permute.xlu0 %549
        %v551 = vperm.slane %v529, %v502
        %v552 = vperm.slane %v532, %v502
        %v553 = vperm.slane %v535, %v502
        %v554 = vperm.slane %v538, %v502
        %v555 = vperm.slane %v541, %v502
        %v556 = vperm.slane %v544, %v502
        %v557 = vperm.slane %v547, %v502
        %v558 = vperm.slane %v550, %v502
        %v559 = vsel %vm504, %v552, %v551
        %v560 = vsel %vm505, %v553, %v559
        %v561 = vsel %vm507, %v554, %v560
        %v562 = vsel %vm509, %v555, %v561
        %v563 = vsel %vm511, %v556, %v562
        %v564 = vsel %vm513, %v557, %v563
        %v565 = vsel %vm515, %v558, %v564
        %v567 = vadd.f32 %v518, %v565
        %vm568 = vcmp.gt.f32.partialorder %v567, 0.0
        %v569 = vmul.f32 %v567, 0.2
        %v570 = vsel %vm568, %v567, %v569
        %vm571 = vcmask 64512
        %v572 = vsel %vm571, %v570, -inf
        %573 = vmax.xlane.f32.xlu0 %v572
        %v574 = vpop.xlane.xlu0 %573
        %v575 = vsub.f32 %v570, %v574
        %v576 = vmul.f32 %v575, 1.442695
        %v577 = vpow.pop %v576
        %v578 = vsel %vm571, %v577, 0.0
        %579 = vadd.xlane.f32.xlu0 %v578
        %v580 = vpop.xlane.xlu0 %579
        %v581 = vrcp.pop %v580
        %v582 = vmul.f32 %v577, %v581
        %v584 = vsel %vm571, %v582, 0
        %586 = vmatpush.msra.mxu0 0.0
        %587 = vmatpush.msra.mxu0 0.0
        %588 = vmatpush.msra.mxu0 0.0
        %589 = vmatpush.msra.mxu0 0.0
        %590 = vmatpush.msra.mxu0 0.0
        %591 = vmatpush.msra.mxu0 0.0
        %592 = vmatpush.msra.mxu0 0.0
        %593 = vmatpush.msra.mxu0 0.0
        %594 = vmatpush.msra.mxu0 0.0
        %595 = vmatpush.msra.mxu0 0.0
        %596 = vmatpush.msra.mxu0 0.0
        %597 = vmatpush.msra.mxu0 0.0
        %598 = vmatpush.msra.mxu0 0.0
        %599 = vmatpush.msra.mxu0 0.0
        %600 = vmatpush.msra.mxu0 0.0
        %601 = vmatpush.msra.mxu0 %v451
        %602 = vmatmul.f32.gmra.mxu0 %v584
        %v603 = vpop.f32.mrf.mxu0
        %v604 = vadd.f32 0.0, %v603
        %605 = vdwg.mxu0
        %v606 = vadd.f32 %v407, %v604
        %s607 = scalar_lea.vmem %s6, 32
        %v608 = vld [vmem:[%s607] sm:$0xff]
        %v609 = vld [vmem:[%s607 + $0x8] sm:$0xff]
        %v610 = vld [vmem:[%s607 + $0x10] sm:$0xff]
        %v611 = vld [vmem:[%s607 + $0x18] sm:$0xff]
        %s612 = scalar_lea.vmem %s7, 1
        %v613 = vld [vmem:[%s612] sm:$0x1]
        %s614 = scalar_lea.vmem %s8, 1
        %v615 = vld [vmem:[%s614] sm:$0x1]
        %s616 = scalar_lea.vmem %s9, 1
        %v617 = vld [vmem:[%s616] sm:$0x1]
        %s618 = scalar_lea.vmem %s4, 1
        %v619 = vld [vmem:[%s618] sm:$0x1]
        %s620 = scalar_lea.vmem %s5, 1
        %v621 = vld [vmem:[%s620] sm:$0x1]
        %v623 = vperm.slane %v613, 0
        %v626 = vsel %vm429, %v606, 0
        %628 = vmatpush.msra.mxu0 0.0
        %629 = vmatpush.msra.mxu0 0.0
        %630 = vmatpush.msra.mxu0 0.0
        %631 = vmatpush.msra.mxu0 0.0
        %632 = vmatpush.msra.mxu0 0.0
        %633 = vmatpush.msra.mxu0 0.0
        %634 = vmatpush.msra.mxu0 0.0
        %635 = vmatpush.msra.mxu0 0.0
        %636 = vmatpush.msra.mxu0 0.0
        %637 = vmatpush.msra.mxu0 0.0
        %638 = vmatpush.msra.mxu0 0.0
        %639 = vmatpush.msra.mxu0 0.0
        %640 = vmatpush.msra.mxu0 %v611
        %641 = vmatpush.msra.mxu0 %v610
        %642 = vmatpush.msra.mxu0 %v609
        %643 = vmatpush.msra.mxu0 %v608
        %644 = vmatmul.f32.gmra.mxu0 %v626
        %v645 = vpop.f32.mrf.mxu0
        %v646 = vadd.f32 %v623, %v645
        %647 = vdwg.mxu0
        %v649 = vperm.slane %v615, 0
        %v651 = vmul.f32 %v646, %v649
        %v652 = vsel %vm429, %v651, 0.0
        %653 = vadd.xlane.f32.xlu0 %v652
        %v654 = vpop.xlane.xlu0 %653
        %v656 = vperm.slane %v617, 0
        %v658 = vmul.f32 %v646, %v656
        %v659 = vsel %vm429, %v658, 0.0
        %660 = vadd.xlane.f32.xlu0 %v659
        %v661 = vpop.xlane.xlu0 %660
        %v663 = vperm.slane %v619, 0
        %v665 = vmul.f32 %v409, %v663
        %v666 = vmul.f32 %v410, %v663
        %v667 = vmul.f32 %v411, %v663
        %v668 = vmul.f32 %v412, %v663
        %v669 = vmul.f32 %v413, %v663
        %v670 = vmul.f32 %v414, %v663
        %v671 = vmul.f32 %v415, %v663
        %v672 = vmul.f32 %v416, %v663
        %v673 = vadd.f32 %v665, 0.0
        %v674 = vadd.f32 %v666, 0.0
        %v675 = vadd.f32 %v667, 0.0
        %v676 = vadd.f32 %v668, 0.0
        %v677 = vadd.f32 %v669, 0.0
        %v678 = vadd.f32 %v670, 0.0
        %v679 = vadd.f32 %v671, 0.0
        %v680 = vadd.f32 %v672, 0.0
        %v682 = vperm.slane %v621, 0
        %683 = vset.pattern.permute.xlu0 0
        %684 = vperm.xlu0 %683, %v682
        %v685 = vpop.permute.xlu0 %684
        %v687 = vadd.f32 %v673, %v685
        %v688 = vadd.f32 %v674, %v685
        %v689 = vadd.f32 %v675, %v685
        %v690 = vadd.f32 %v676, %v685
        %v691 = vadd.f32 %v677, %v685
        %v692 = vadd.f32 %v678, %v685
        %v693 = vadd.f32 %v679, %v685
        %v694 = vadd.f32 %v680, %v685
        %v696 = vperm.slane %v661, %v502
        %v697 = vsel %vm505, %v696, %v696
        %v698 = vsel %vm507, %v696, %v697
        %v699 = vsel %vm509, %v696, %v698
        %v700 = vsel %vm511, %v696, %v699
        %v701 = vsel %vm513, %v696, %v700
        %v702 = vsel %vm515, %v696, %v701
        %v704 = vadd.f32 %v654, %v702
        %713 = vset.pattern.permute.xlu0 0
        %714 = vperm.xlu0 %713, %v687
        %v715 = vpop.permute.xlu0 %714
        %716 = vset.pattern.permute.xlu0 0
        %717 = vperm.xlu0 %716, %v688
        %v718 = vpop.permute.xlu0 %717
        %719 = vset.pattern.permute.xlu0 0
        %720 = vperm.xlu0 %719, %v689
        %v721 = vpop.permute.xlu0 %720
        %722 = vset.pattern.permute.xlu0 0
        %723 = vperm.xlu0 %722, %v690
        %v724 = vpop.permute.xlu0 %723
        %725 = vset.pattern.permute.xlu0 0
        %726 = vperm.xlu0 %725, %v691
        %v727 = vpop.permute.xlu0 %726
        %728 = vset.pattern.permute.xlu0 0
        %729 = vperm.xlu0 %728, %v692
        %v730 = vpop.permute.xlu0 %729
        %731 = vset.pattern.permute.xlu0 0
        %732 = vperm.xlu0 %731, %v693
        %v733 = vpop.permute.xlu0 %732
        %734 = vset.pattern.permute.xlu0 0
        %735 = vperm.xlu0 %734, %v694
        %v736 = vpop.permute.xlu0 %735
        %v737 = vperm.slane %v715, %v502
        %v738 = vperm.slane %v718, %v502
        %v739 = vperm.slane %v721, %v502
        %v740 = vperm.slane %v724, %v502
        %v741 = vperm.slane %v727, %v502
        %v742 = vperm.slane %v730, %v502
        %v743 = vperm.slane %v733, %v502
        %v744 = vperm.slane %v736, %v502
        %v745 = vsel %vm504, %v738, %v737
        %v746 = vsel %vm505, %v739, %v745
        %v747 = vsel %vm507, %v740, %v746
        %v748 = vsel %vm509, %v741, %v747
        %v749 = vsel %vm511, %v742, %v748
        %v750 = vsel %vm513, %v743, %v749
        %v751 = vsel %vm515, %v744, %v750
        %v753 = vadd.f32 %v704, %v751
        %vm754 = vcmp.gt.f32.partialorder %v753, 0.0
        %v755 = vmul.f32 %v753, 0.2
        %v756 = vsel %vm754, %v753, %v755
        %v757 = vsel %vm571, %v756, -inf
        %758 = vmax.xlane.f32.xlu0 %v757
        %v759 = vpop.xlane.xlu0 %758
        %v760 = vsub.f32 %v756, %v759
        %v761 = vmul.f32 %v760, 1.442695
        %v762 = vpow.pop %v761
        %v763 = vsel %vm571, %v762, 0.0
        %764 = vadd.xlane.f32.xlu0 %v763
        %v765 = vpop.xlane.xlu0 %764
        %v766 = vrcp.pop %v765
        %v767 = vmul.f32 %v762, %v766
        %v769 = vsel %vm571, %v767, 0
        %771 = vmatpush.msra.mxu0 0.0
        %772 = vmatpush.msra.mxu0 0.0
        %773 = vmatpush.msra.mxu0 0.0
        %774 = vmatpush.msra.mxu0 0.0
        %775 = vmatpush.msra.mxu0 0.0
        %776 = vmatpush.msra.mxu0 0.0
        %777 = vmatpush.msra.mxu0 0.0
        %778 = vmatpush.msra.mxu0 0.0
        %779 = vmatpush.msra.mxu0 0.0
        %780 = vmatpush.msra.mxu0 0.0
        %781 = vmatpush.msra.mxu0 0.0
        %782 = vmatpush.msra.mxu0 0.0
        %783 = vmatpush.msra.mxu0 0.0
        %784 = vmatpush.msra.mxu0 0.0
        %785 = vmatpush.msra.mxu0 0.0
        %786 = vmatpush.msra.mxu0 %v646
        %787 = vmatmul.f32.gmra.mxu0 %v769
        %v788 = vpop.f32.mrf.mxu0
        %v789 = vadd.f32 0.0, %v788
        %790 = vdwg.mxu0
        %v791 = vadd.f32 %v606, %v789
        %792 = vst.msk [vmem:[%s365] sm:$0xff] %vm429, %v791
        %s793 = sand.u32 %s252, 1
        %s794 = scalar_lea.sflag [#allocation3], %s793
        %s795 = sand.u32 %s252, 1
        %s796 = smul.addr %s795, 8
        %s797 = scalar_lea.vmem [#allocation2], %s796
        // Predicated region
        $region61: #{tpu_custom_call.1} parent=59 // pred_check
          %p798 = pneg %p262
        $region62: #{tpu_custom_call.1} parent=59 // pred_check_branch
          %800 = sbr.rel (%p798) target = $region64
        $region63: #{tpu_custom_call.1} parent=59 // pred_region
          %802 = vsyncadd %s794, 0
          %s803 = smul.addr %s24, 8
          %s804 = scalar_lea.hbm %s10, %s803
          %s806 = sshll.u32 %s797, 4
          %s807 = int_to_ptr.vmem [resolvable:$true] %s806
          %s808 = sshll.u32 %s804, 4
          %s809 = int_to_ptr.hbm [resolvable:$true] %s808
          %811 = dma.vmem_to_hbm [thread:$0]  %s807, 128, %s809, %s794
        $region64: #{tpu_custom_call.1} parent=59 // pred_fallthru
          _
      $region60: #{tpu_custom_call.1} parent=5 // pred_fallthru
        _
      %p812 = scmp.le.s32.totalorder 2, %s19
      // Predicated region
      $region65: #{tpu_custom_call.1} parent=5 // pred_check
        %p813 = pneg %p812
      $region66: #{tpu_custom_call.1} parent=5 // pred_check_branch
        %815 = sbr.rel (%p813) target = $region68
      $region67: #{tpu_custom_call.1} parent=5 // pred_region
        %s816 = ssub.s32 %s19, 2
        // Predicated region
        $region69: #{tpu_custom_call.1} parent=67 // pred_check
          %p817 = pneg %p268
        $region70: #{tpu_custom_call.1} parent=67 // pred_check_branch
          %819 = sbr.rel (%p817) target = $region72
        $region71: #{tpu_custom_call.1} parent=67 // pred_region
          %s820 = sand.u32 %s253, 1
          %s821 = scalar_lea.sflag [#allocation3], %s820
          %s822 = sand.u32 %s253, 1
          %s823 = smul.addr %s822, 8
          %s824 = scalar_lea.vmem [#allocation2], %s823
          %826 = dma.done %s821, 128
        $region72: #{tpu_custom_call.1} parent=67 // pred_fallthru
          _
      $region68: #{tpu_custom_call.1} parent=5 // pred_fallthru
        _
    $region6: #{tpu_custom_call.1} parent=1 // loop_footer
      %s23 = sadd.s32 1, %s19
    $region7: #{tpu_custom_call.1} parent=1 // loop_footer_branch
      %18 = sbr.rel target = $region3
    $region8: #{tpu_custom_call.1} parent=1 // loop_exit
      _
    %827 = vsyncpa [#allocation3], 1
    %s828 = scalar_lea.sflag [#allocation3], 1
    %829 = vsyncpa %s828, 1

</llo_original>
